<compile_context>
chip_gen: v6e
topology: v6e:2x2x1
jax: 0.10.0
libtpu: 0.0.40
codegen_flags: <defaults>
</compile_context>

<pallas_src>
import functools

import jax
import jax.numpy as jnp
from jax.experimental import pallas as pl
from jax.experimental.pallas import tpu as pltpu


def _round_up(v, m):
    return (v + m - 1) // m * m


def _fused_pass1_kernel(x_ref, w_ref, bv_ref, sv_ref, acc_ref, m_ref, s_ref, *,
                        n_a, n_b, l_valid, need_mask, compute_dtype,
                        approx_recip):
    """Stacked [wA; wB; wV] matmul + online L-softmax partials + softmax(V).

    x_ref:   (1, C, lt)        input tile, original dtype (cast to MXU dtype here)
    w_ref:   (n_a + 2*n_b, C)  stacked conv weights, compute dtype
    bv_ref:  (n_b, 1) f32      convV bias (padded rows = -1e30 -> zero softmax weight)
    sv_ref:  (1, n_b, lt)      OUT: softmax(V) tile, compute dtype
    acc_ref: (1, 1, n_b, n_a)  OUT accumulator: un-normalized descriptor partial
    m_ref:   (1, 1, n_b, 1)    OUT accumulator: running max of B logits over L
    s_ref:   (1, 1, n_b, 1)    OUT accumulator: running sum of exp(B - m)
    """
    l_idx = pl.program_id(2)

    @pl.when(l_idx == 0)
    def _():
        acc_ref[...] = jnp.zeros(acc_ref.shape, acc_ref.dtype)
        # Finite "-inf" keeps every exp() nan-free even on fully padded tiles.
        m_ref[...] = jnp.full(m_ref.shape, -1e30, m_ref.dtype)
        s_ref[...] = jnp.zeros(s_ref.shape, s_ref.dtype)

    x = x_ref[0].astype(compute_dtype)                       # (C, lt)
    lt = x.shape[-1]

    # Single stacked 1x1-conv matmul on the MXU: [A; B; V] = [wA; wB; wV] @ x.
    abv = jnp.dot(w_ref[...], x, preferred_element_type=jnp.float32)
    a = abv[:n_a]                        # (n_a, lt)  convA bias folded in later
    b = abv[n_a:n_a + n_b]               # (n_b, lt)  convB bias cancels in softmax
    v = abv[n_a + n_b:] + bv_ref[...]    # (n_b, lt)

    if need_mask:                        # static: only when L % l_tile != 0
        # Only the globally last tile actually has padded lanes; elsewhere this
        # where() is an all-true select (x itself is zero-padded in HBM).
        col = ((pl.program_id(0) * pl.num_programs(2) + l_idx) * lt
               + jax.lax.broadcasted_iota(jnp.int32, b.shape, 1))
        b = jnp.where(col < l_valid, b, -jnp.inf)

    # Online softmax over L (rows of b), flash-attention style.
    m_prev = m_ref[0, 0]                                     # (n_b, 1)
    m_new = jnp.maximum(m_prev, jnp.max(b, axis=-1, keepdims=True))
    alpha = jnp.exp(m_prev - m_new)                          # (n_b, 1)
    p = jnp.exp(b - m_new)                                   # (n_b, lt); 0 on padded lanes

    s_ref[0, 0] = alpha * s_ref[0, 0] + jnp.sum(p, axis=-1, keepdims=True)
    # acc[n, m] += sum_l p[n, l] * a[m, l].  Same NT dimension numbers as the
    # reference flash kernels' q @ k^T: contract the lane (L) dim of both MXU
    # operands directly -- no l_tile-wide transpose is materialized.
    acc_ref[0, 0] = alpha * acc_ref[0, 0] + jax.lax.dot_general(
        p.astype(compute_dtype), a.astype(compute_dtype),
        (((1,), (1,)), ((), ())), preferred_element_type=jnp.float32)
    m_ref[0, 0] = m_new

    # Channel softmax of V (local per spatial column) -> softmax(V) tile.
    v = v - jnp.max(v, axis=0, keepdims=True)
    ev = jnp.exp(v)                                          # (n_b, lt)
    inv_den = pl.reciprocal(jnp.sum(ev, axis=0, keepdims=True),
                            approx=approx_recip)
    sv_ref[0] = (ev * inv_den).astype(sv_ref.dtype)


def _output_kernel(gd_ref, sv_ref, z_ref, *, compute_dtype):
    # gd_ref: (1, c_m, n_b) f32;  sv_ref: (1, n_b, lt) compute dtype
    z = jnp.dot(gd_ref[0].astype(compute_dtype), sv_ref[0],
                preferred_element_type=jnp.float32)          # (c_m, lt)
    z_ref[0] = z.astype(z_ref.dtype)


def _vmem_budget_bytes():
    """Generation-aware VMEM budget (v7x only has 64 MiB; v5e/v6e have 128)."""
    try:
        cap = int(pltpu.get_tpu_info().vmem_capacity_bytes)
    except Exception:                                        # pragma: no cover
        cap = 64 << 20                                       # conservative fallback
    return max(cap - (16 << 20), 24 << 20)                   # leave Mosaic headroom


def double_attention(x_nchw, params, *, compute_dtype=jnp.bfloat16, l_tile=None):
    """Forward pass of DoubleAttentionLayer (reconstruct=False).

    x_nchw: (B, C, H, W).  Returns (B, c_m, H, W) in x's dtype.
    """
    wa, ba, wb, wv, bv = (params["wa"], params["ba"], params["wb"],
                          params["wv"], params["bv"])
    # params["bb"] (convB bias) is intentionally unused: a per-row constant
    # cancels exactly in the softmax over the spatial dimension.
    B, C, H, W = x_nchw.shape
    L = H * W
    c_m, c_n = wa.shape[0], wb.shape[0]

    out_dtype = x_nchw.dtype
    xb = jnp.dtype(x_nchw.dtype).itemsize
    cb = jnp.dtype(compute_dtype).itemsize
    ob = jnp.dtype(out_dtype).itemsize
    is_bf16 = jnp.dtype(compute_dtype) == jnp.dtype(jnp.bfloat16)
    pad_g = 16 if is_bf16 else 8          # bf16 sublane packing granule
    c_mp, c_np = _round_up(c_m, pad_g), _round_up(c_n, pad_g)
    kw = c_mp + 2 * c_np                  # stacked [wA; wB; wV] rows

    budget = _vmem_budget_bytes()

    def pass1_vmem(lt):                   # double-buffered blocks + f32 temps
        return (2 * C * lt * xb + 2 * kw * C * cb + 2 * c_np * lt * cb
                + (kw + 4 * c_np) * lt * 4 + 8 * c_np * (c_mp + 2) * 4)

    if l_tile is None:
        # Roofline saturates by 512-1024 lanes; shrink further only if the
        # generation's VMEM budget requires it.
        l_tile = min(_round_up(L, 128), 1024)
        while l_tile > 128 and pass1_vmem(l_tile) > budget:
            l_tile = max(128, _round_up(l_tile // 2, 128))
    assert l_tile % 128 == 0

    l_pad = _round_up(L, l_tile)
    n_lt = l_pad // l_tile
    # Split the L reduction over a leading "parallel" grid axis so pass 1 can
    # use both v7x TensorCores even at batch 1; partials are merged below.
    n_split = 2 if (n_lt % 2 == 0 and n_lt >= 2) else 1
    n_lt_ps = n_lt // n_split
    need_mask = l_pad != L
    approx = is_bf16

    # Host-side prep: x is NOT cast (tiles are cast in-kernel) and is only
    # padded when L is not a multiple of the 128-aligned lane tile.
    x = x_nchw.reshape(B, C, L)
    if need_mask:
        x = jnp.pad(x, ((0, 0), (0, 0), (0, l_pad - L)))
    w_all = jnp.concatenate(
        [jnp.pad(wa, ((0, c_mp - c_m), (0, 0))),
         jnp.pad(wb, ((0, c_np - c_n), (0, 0))),
         jnp.pad(wv, ((0, c_np - c_n), (0, 0)))], axis=0).astype(compute_dtype)
    # Padded V rows get a very negative bias -> exactly zero channel-softmax weight.
    bv_p = jnp.pad(bv, ((0, c_np - c_n), (0, 0)),
                   constant_values=-1e30).astype(jnp.float32)

    def vmem_limit(need):
        return int(min(budget, max(int(need) + (2 << 20), 16 << 20)))

    # ---- pass 1: softmax(V) + per-(split, batch) descriptor partials ----
    cost1 = pl.CostEstimate(
        flops=int(2 * B * l_pad * (C * kw + c_mp * c_np)),
        transcendentals=int(2 * B * l_pad * c_np),
        bytes_accessed=int(B * C * l_pad * xb + kw * C * cb
                           + B * c_np * l_pad * cb
                           + n_split * B * c_np * (c_mp + 2) * 4))
    sv, acc_parts, m_parts, s_parts = pl.pallas_call(
        functools.partial(_fused_pass1_kernel, n_a=c_mp, n_b=c_np, l_valid=L,
                          need_mask=need_mask, compute_dtype=compute_dtype,
                          approx_recip=approx),
        out_shape=(
            jax.ShapeDtypeStruct((B, c_np, l_pad), compute_dtype),        # softmax(V)
            jax.ShapeDtypeStruct((n_split, B, c_np, c_mp), jnp.float32),  # acc partials
            jax.ShapeDtypeStruct((n_split, B, c_np, 1), jnp.float32),     # running max
            jax.ShapeDtypeStruct((n_split, B, c_np, 1), jnp.float32),     # running sum
        ),
        grid_spec=pltpu.PrefetchScalarGridSpec(
            num_scalar_prefetch=0,
            grid=(n_split, B, n_lt_ps),
            in_specs=[
                pl.BlockSpec((1, C, l_tile), lambda s, b, l: (b, 0, s * n_lt_ps + l)),
                pl.BlockSpec((kw, C), lambda s, b, l: (0, 0)),
                pl.BlockSpec((c_np, 1), lambda s, b, l: (0, 0)),
            ],
            out_specs=[
                pl.BlockSpec((1, c_np, l_tile), lambda s, b, l: (b, 0, s * n_lt_ps + l)),
                pl.BlockSpec((1, 1, c_np, c_mp), lambda s, b, l: (s, b, 0, 0)),
                pl.BlockSpec((1, 1, c_np, 1), lambda s, b, l: (s, b, 0, 0)),
                pl.BlockSpec((1, 1, c_np, 1), lambda s, b, l: (s, b, 0, 0)),
            ]),
        compiler_params=pltpu.CompilerParams(
            dimension_semantics=("parallel", "parallel", "arbitrary"),
            vmem_limit_bytes=vmem_limit(pass1_vmem(l_tile))),
        cost_estimate=cost1,
    )(x, w_all, bv_p)

    # Tiny exact online-softmax combine of the per-split partials (plain JAX),
    # then fold convA's bias (softmax rows sum to 1).  All O(B * c_m * c_n).
    m_tot = jnp.max(m_parts, axis=0)                               # (B, c_np, 1)
    scale = jnp.exp(m_parts - m_tot)                               # (S, B, c_np, 1)
    s_tot = jnp.sum(scale * s_parts, axis=0)                       # (B, c_np, 1)
    acc_tot = jnp.sum(scale * acc_parts, axis=0)                   # (B, c_np, c_mp)
    gd = jnp.swapaxes(acc_tot / s_tot, 1, 2)[:, :c_m] + ba[None]   # (B, c_m, c_np) f32

    # ---- pass 2: z = gd @ softmax(V); lane-dense output at exactly c_m rows ----
    need2 = (2 * c_m * c_np * 4 + 2 * c_np * l_tile * cb
             + 2 * c_m * l_tile * ob + c_m * l_tile * 4)
    cost2 = pl.CostEstimate(
        flops=int(2 * B * l_pad * c_m * c_np),
        transcendentals=0,
        bytes_accessed=int(B * c_np * l_pad * cb + B * c_m * c_np * 4
                           + B * c_m * l_pad * ob))
    z = pl.pallas_call(
        functools.partial(_output_kernel, compute_dtype=compute_dtype),
        out_shape=jax.ShapeDtypeStruct((B, c_m, l_pad), out_dtype),
        grid_spec=pltpu.PrefetchScalarGridSpec(
            num_scalar_prefetch=0,
            grid=(B, n_lt),
            in_specs=[
                pl.BlockSpec((1, c_m, c_np), lambda b, l: (b, 0, 0)),
                pl.BlockSpec((1, c_np, l_tile), lambda b, l: (b, 0, l)),
            ],
            out_specs=pl.BlockSpec((1, c_m, l_tile), lambda b, l: (b, 0, l))),
        compiler_params=pltpu.CompilerParams(
            dimension_semantics=("parallel", "parallel"),
            vmem_limit_bytes=vmem_limit(need2)),
        cost_estimate=cost2,
    )(gd, sv)

    if need_mask:
        z = z[:, :, :L]
    return z.reshape(B, c_m, H, W)


def _reference(x_nchw, params):
    """Plain-JAX reference matching the PyTorch forward semantics."""
    wa, ba, wb, bb, wv, bv = (params["wa"], params["ba"], params["wb"],
                              params["bb"], params["wv"], params["bv"])
    B, C, H, W = x_nchw.shape
    L = H * W
    x = x_nchw.reshape(B, C, L)
    A = jnp.einsum("mc,bcl->bml", wa, x) + ba[None]
    Bf = jnp.einsum("nc,bcl->bnl", wb, x) + bb[None]
    V = jnp.einsum("nc,bcl->bnl", wv, x) + bv[None]
    attn_maps = jax.nn.softmax(Bf, axis=-1)
    global_desc = jnp.einsum("bml,bnl->bmn", A, attn_maps)
    attn_vecs = jax.nn.softmax(V, axis=1)
    Z = jnp.einsum("bmn,bnl->bml", global_desc, attn_vecs)
    return Z.reshape(B, wa.shape[0], H, W)


def init_params(key, in_channels, c_m, c_n):
    ks = jax.random.split(key, 6)
    scale = 1.0 / jnp.sqrt(in_channels)
    return {
        "wa": jax.random.normal(ks[0], (c_m, in_channels), jnp.float32) * scale,
        "ba": jax.random.normal(ks[1], (c_m, 1), jnp.float32) * scale,
        "wb": jax.random.normal(ks[2], (c_n, in_channels), jnp.float32) * scale,
        "bb": jax.random.normal(ks[3], (c_n, 1), jnp.float32) * scale,
        "wv": jax.random.normal(ks[4], (c_n, in_channels), jnp.float32) * scale,
        "bv": jax.random.normal(ks[5], (c_n, 1), jnp.float32) * scale,
    }


if __name__ == "__main__":
    B, C, H, W = 2, 4, 16, 16
    c_m, c_n = 8, 8

    key = jax.random.PRNGKey(0)
    kx, kp = jax.random.split(key)
    x = jax.random.normal(kx, (B, C, H, W), jnp.float32)
    params = init_params(kp, C, c_m, c_n)

    ref = _reference(x, params)

    # 1) default bf16-MXU path (single L tile).  Compare against a reference
    #    whose MXU operands (x, weights) were quantized the same way, so the
    #    check isolates kernel math from intentional bf16 input casts.
    out_bf16 = jax.block_until_ready(double_attention(x, params))
    assert out_bf16.shape == (B, c_m, H, W)
    q = {k: (v.astype(jnp.bfloat16).astype(jnp.float32)
             if k in ("wa", "wb", "wv") else v) for k, v in params.items()}
    ref_q = _reference(x.astype(jnp.bfloat16).astype(jnp.float32), q)
    assert jnp.allclose(out_bf16, ref_q, atol=2e-2, rtol=2e-2), "bf16 kernel mismatch"
    assert bool(jnp.all(jnp.isfinite(out_bf16)))

    # 2) f32 path, 8 L tiles of 128: exercises both the in-kernel online-softmax
    #    accumulation and the 2-way L-split + host combine; must match tightly.
    x2 = jax.random.normal(jax.random.fold_in(kx, 1), (B, C, 32, 32), jnp.float32)
    out_f32 = jax.block_until_ready(
        double_attention(x2, params, compute_dtype=jnp.float32, l_tile=128))
    assert out_f32.shape == (B, c_m, 32, 32)
    assert jnp.allclose(out_f32, _reference(x2, params),
                        atol=2e-4, rtol=2e-4), "f32 kernel mismatch"

    # 3) f32 path with L not a multiple of 128: exercises the pad + -inf lane
    #    masking + tail-slice path.
    x3 = jax.random.normal(jax.random.fold_in(kx, 2), (B, C, 10, 10), jnp.float32)
    out_pad = jax.block_until_ready(
        double_attention(x3, params, compute_dtype=jnp.float32))
    assert out_pad.shape == (B, c_m, 10, 10)
    assert jnp.allclose(out_pad, _reference(x3, params),
                        atol=2e-4, rtol=2e-4), "padded-L kernel mismatch"
    assert bool(jnp.all(jnp.isfinite(out_pad)))

    print("KERNEL_OK")
</pallas_src>

<mosaic_0001>
module attributes {stable_mosaic.version = 11 : i64} {
  func.func @_fused_pass1_kernel(%arg0: i32, %arg1: i32, %arg2: i32, %arg3: memref<1x4x256xf32, #tpu.memory_space<vmem>>, %arg4: memref<48x4xbf16, #tpu.memory_space<vmem>>, %arg5: memref<16x1xf32, #tpu.memory_space<vmem>>, %arg6: memref<1x16x256xbf16, #tpu.memory_space<vmem>>, %arg7: memref<1x1x16x16xf32, #tpu.memory_space<vmem>>, %arg8: memref<1x1x16x1xf32, #tpu.memory_space<vmem>>, %arg9: memref<1x1x16x1xf32, #tpu.memory_space<vmem>>) attributes {dimension_semantics = [#tpu.dimension_semantics<parallel>, #tpu.dimension_semantics<parallel>, #tpu.dimension_semantics<arbitrary>], iteration_bounds = array<i64: 1, 2, 1>, scalar_prefetch = 0 : i64, scratch_operands = 0 : i64, tpu.core_type = #tpu.core_type<tc>, window_params = [{transform_indices = @transform_0, window_bounds = array<i64: 1, 4, 256>}, {pipeline_mode = #tpu.pipeline_mode<synchronous>, transform_indices = @transform_1, window_bounds = array<i64: 48, 4>}, {pipeline_mode = #tpu.pipeline_mode<synchronous>, transform_indices = @transform_2, window_bounds = array<i64: 16, 1>}, {transform_indices = @transform_3, window_bounds = array<i64: 1, 16, 256>}, {transform_indices = @transform_4, window_bounds = array<i64: 1, 1, 16, 16>}, {transform_indices = @transform_5, window_bounds = array<i64: 1, 1, 16, 1>}, {transform_indices = @transform_6, window_bounds = array<i64: 1, 1, 16, 1>}]} {
    %c0_i32 = arith.constant 0 : i32
    %0 = arith.cmpi eq, %arg2, %c0_i32 : i32
    %1 = arith.extui %0 : i1 to i32
    %c0_i32_0 = arith.constant 0 : i32
    %2 = arith.cmpi ne, %1, %c0_i32_0 : i32
    scf.if %2 {
      %cst_39 = arith.constant 0.000000e+00 : f32
      %61 = vector.broadcast %cst_39 : f32 to vector<1x1x16x16xf32>
      %c0_40 = arith.constant 0 : index
      %c0_41 = arith.constant 0 : index
      %c0_42 = arith.constant 0 : index
      %c0_43 = arith.constant 0 : index
      %62 = vector.load %arg7[%c0_40, %c0_41, %c0_42, %c0_43] : memref<1x1x16x16xf32, #tpu.memory_space<vmem>>, vector<1x1x16x16xf32>
      tpu.vector_store %arg7[%c0_40, %c0_41, %c0_42, %c0_43], %61 {strides = array<i32>} : memref<1x1x16x16xf32, #tpu.memory_space<vmem>>, vector<1x1x16x16xf32>,
      %cst_44 = arith.constant -1.000000e+30 : f32
      %63 = vector.broadcast %cst_44 : f32 to vector<1x1x16x1xf32>
      %c0_45 = arith.constant 0 : index
      %c0_46 = arith.constant 0 : index
      %c0_47 = arith.constant 0 : index
      %c0_48 = arith.constant 0 : index
      %64 = vector.load %arg8[%c0_45, %c0_46, %c0_47, %c0_48] : memref<1x1x16x1xf32, #tpu.memory_space<vmem>>, vector<1x1x16x1xf32>
      tpu.vector_store %arg8[%c0_45, %c0_46, %c0_47, %c0_48], %63 {strides = array<i32>} : memref<1x1x16x1xf32, #tpu.memory_space<vmem>>, vector<1x1x16x1xf32>,
      %cst_49 = arith.constant 0.000000e+00 : f32
      %65 = vector.broadcast %cst_49 : f32 to vector<1x1x16x1xf32>
      %c0_50 = arith.constant 0 : index
      %c0_51 = arith.constant 0 : index
      %c0_52 = arith.constant 0 : index
      %c0_53 = arith.constant 0 : index
      %66 = vector.load %arg9[%c0_50, %c0_51, %c0_52, %c0_53] : memref<1x1x16x1xf32, #tpu.memory_space<vmem>>, vector<1x1x16x1xf32>
      tpu.vector_store %arg9[%c0_50, %c0_51, %c0_52, %c0_53], %65 {strides = array<i32>} : memref<1x1x16x1xf32, #tpu.memory_space<vmem>>, vector<1x1x16x1xf32>,
    } else {
    }
    %c0 = arith.constant 0 : index
    %c0_1 = arith.constant 0 : index
    %c0_2 = arith.constant 0 : index
    %3 = vector.load %arg3[%c0, %c0_1, %c0_2] : memref<1x4x256xf32, #tpu.memory_space<vmem>>, vector<1x4x256xf32>
    %4 = vector.shape_cast %3 : vector<1x4x256xf32> to vector<4x256xf32>
    %5 = arith.truncf %4 : vector<4x256xf32> to vector<4x256xbf16>
    %c0_3 = arith.constant 0 : index
    %c0_4 = arith.constant 0 : index
    %6 = vector.load %arg4[%c0_3, %c0_4] : memref<48x4xbf16, #tpu.memory_space<vmem>>, vector<48x4xbf16>
    %cst = arith.constant dense<0.000000e+00> : vector<48x256xf32>
    %7 = tpu.matmul %6, %5, %cst {dimension_numbers = #tpu.dot_dimension_numbers<[1], [0], [0], [1], [0, 0, 1, 1], [], []>} : vector<48x4xbf16>, vector<4x256xbf16>, vector<48x256xf32> -> vector<48x256xf32>
    %8 = vector.extract_strided_slice %7 {offsets = [0, 0], sizes = [16, 256], strides = [1, 1]} : vector<48x256xf32> to vector<16x256xf32>
    %9 = vector.extract_strided_slice %7 {offsets = [16, 0], sizes = [16, 256], strides = [1, 1]} : vector<48x256xf32> to vector<16x256xf32>
    %10 = vector.extract_strided_slice %7 {offsets = [32, 0], sizes = [16, 256], strides = [1, 1]} : vector<48x256xf32> to vector<16x256xf32>
    %c0_5 = arith.constant 0 : index
    %c0_6 = arith.constant 0 : index
    %11 = vector.load %arg5[%c0_5, %c0_6] : memref<16x1xf32, #tpu.memory_space<vmem>>, vector<16x1xf32>
    %12 = vector.broadcast %11 : vector<16x1xf32> to vector<16x256xf32>
    %13 = arith.addf %10, %12 : vector<16x256xf32>
    %c0_7 = arith.constant 0 : index
    %c0_8 = arith.constant 0 : index
    %c0_9 = arith.constant 0 : index
    %c0_10 = arith.constant 0 : index
    %14 = vector.load %arg8[%c0_7, %c0_8, %c0_9, %c0_10] : memref<1x1x16x1xf32, #tpu.memory_space<vmem>>, vector<1x1x16x1xf32>
    %15 = vector.shape_cast %14 : vector<1x1x16x1xf32> to vector<16x1xf32>
    %cst_11 = arith.constant dense<0xFF800000> : vector<16xf32>
    %16 = vector.multi_reduction <maximumf>, %9, %cst_11 [1] : vector<16x256xf32> to vector<16xf32>
    %17 = vector.shape_cast %16 : vector<16xf32> to vector<16x1xf32>
    %18 = arith.maximumf %15, %17 : vector<16x1xf32>
    %19 = arith.subf %15, %18 : vector<16x1xf32>
    %20 = math.exp %19 : vector<16x1xf32>
    %21 = vector.broadcast %18 : vector<16x1xf32> to vector<16x256xf32>
    %22 = arith.subf %9, %21 : vector<16x256xf32>
    %23 = math.exp %22 : vector<16x256xf32>
    %c0_12 = arith.constant 0 : index
    %c0_13 = arith.constant 0 : index
    %c0_14 = arith.constant 0 : index
    %c0_15 = arith.constant 0 : index
    %24 = vector.load %arg9[%c0_12, %c0_13, %c0_14, %c0_15] : memref<1x1x16x1xf32, #tpu.memory_space<vmem>>, vector<1x1x16x1xf32>
    %25 = vector.shape_cast %24 : vector<1x1x16x1xf32> to vector<16x1xf32>
    %26 = arith.mulf %20, %25 : vector<16x1xf32>
    %cst_16 = arith.constant dense<0.000000e+00> : vector<16xf32>
    %27 = vector.multi_reduction <add>, %23, %cst_16 [1] : vector<16x256xf32> to vector<16xf32>
    %28 = vector.shape_cast %27 : vector<16xf32> to vector<16x1xf32>
    %29 = arith.addf %26, %28 : vector<16x1xf32>
    %c0_17 = arith.constant 0 : index
    %c0_18 = arith.constant 0 : index
    %c0_19 = arith.constant 0 : index
    %c0_20 = arith.constant 0 : index
    %30 = vector.load %arg9[%c0_17, %c0_18, %c0_19, %c0_20] : memref<1x1x16x1xf32, #tpu.memory_space<vmem>>, vector<1x1x16x1xf32>
    %31 = vector.shape_cast %30 : vector<1x1x16x1xf32> to vector<16x1xf32>
    %32 = vector.shape_cast %29 : vector<16x1xf32> to vector<1x1x16x1xf32>
    tpu.vector_store %arg9[%c0_17, %c0_18, %c0_19, %c0_20], %32 {strides = array<i32>} : memref<1x1x16x1xf32, #tpu.memory_space<vmem>>, vector<1x1x16x1xf32>,
    %c0_21 = arith.constant 0 : index
    %c0_22 = arith.constant 0 : index
    %c0_23 = arith.constant 0 : index
    %c0_24 = arith.constant 0 : index
    %33 = vector.load %arg7[%c0_21, %c0_22, %c0_23, %c0_24] : memref<1x1x16x16xf32, #tpu.memory_space<vmem>>, vector<1x1x16x16xf32>
    %34 = vector.shape_cast %33 : vector<1x1x16x16xf32> to vector<16x16xf32>
    %35 = vector.broadcast %20 : vector<16x1xf32> to vector<16x16xf32>
    %36 = arith.mulf %35, %34 : vector<16x16xf32>
    %37 = arith.truncf %23 : vector<16x256xf32> to vector<16x256xbf16>
    %38 = arith.truncf %8 : vector<16x256xf32> to vector<16x256xbf16>
    %cst_25 = arith.constant dense<0.000000e+00> : vector<16x16xf32>
    %39 = tpu.matmul %37, %38, %cst_25 {dimension_numbers = #tpu.dot_dimension_numbers<[1], [1], [0], [0], [0, 0, 1, 0], [], []>} : vector<16x256xbf16>, vector<16x256xbf16>, vector<16x16xf32> -> vector<16x16xf32>
    %40 = arith.addf %36, %39 : vector<16x16xf32>
    %c0_26 = arith.constant 0 : index
    %c0_27 = arith.constant 0 : index
    %c0_28 = arith.constant 0 : index
    %c0_29 = arith.constant 0 : index
    %41 = vector.load %arg7[%c0_26, %c0_27, %c0_28, %c0_29] : memref<1x1x16x16xf32, #tpu.memory_space<vmem>>, vector<1x1x16x16xf32>
    %42 = vector.shape_cast %41 : vector<1x1x16x16xf32> to vector<16x16xf32>
    %43 = vector.shape_cast %40 : vector<16x16xf32> to vector<1x1x16x16xf32>
    tpu.vector_store %arg7[%c0_26, %c0_27, %c0_28, %c0_29], %43 {strides = array<i32>} : memref<1x1x16x16xf32, #tpu.memory_space<vmem>>, vector<1x1x16x16xf32>,
    %c0_30 = arith.constant 0 : index
    %c0_31 = arith.constant 0 : index
    %c0_32 = arith.constant 0 : index
    %c0_33 = arith.constant 0 : index
    %44 = vector.load %arg8[%c0_30, %c0_31, %c0_32, %c0_33] : memref<1x1x16x1xf32, #tpu.memory_space<vmem>>, vector<1x1x16x1xf32>
    %45 = vector.shape_cast %44 : vector<1x1x16x1xf32> to vector<16x1xf32>
    %46 = vector.shape_cast %18 : vector<16x1xf32> to vector<1x1x16x1xf32>
    tpu.vector_store %arg8[%c0_30, %c0_31, %c0_32, %c0_33], %46 {strides = array<i32>} : memref<1x1x16x1xf32, #tpu.memory_space<vmem>>, vector<1x1x16x1xf32>,
    %cst_34 = arith.constant dense<0xFF800000> : vector<256xf32>
    %47 = vector.multi_reduction <maximumf>, %13, %cst_34 [0] : vector<16x256xf32> to vector<256xf32>
    %48 = vector.shape_cast %47 : vector<256xf32> to vector<1x256xf32>
    %49 = vector.broadcast %48 : vector<1x256xf32> to vector<16x256xf32>
    %50 = arith.subf %13, %49 : vector<16x256xf32>
    %51 = math.exp %50 : vector<16x256xf32>
    %cst_35 = arith.constant dense<0.000000e+00> : vector<256xf32>
    %52 = vector.multi_reduction <add>, %51, %cst_35 [0] : vector<16x256xf32> to vector<256xf32>
    %53 = vector.shape_cast %52 : vector<256xf32> to vector<1x256xf32>
    %54 = tpu.reciprocal %53 {approx = true} : vector<1x256xf32> -> vector<1x256xf32>
    %55 = vector.broadcast %54 : vector<1x256xf32> to vector<16x256xf32>
    %56 = arith.mulf %51, %55 : vector<16x256xf32>
    %57 = arith.truncf %56 : vector<16x256xf32> to vector<16x256xbf16>
    %c0_36 = arith.constant 0 : index
    %c0_37 = arith.constant 0 : index
    %c0_38 = arith.constant 0 : index
    %58 = vector.load %arg6[%c0_36, %c0_37, %c0_38] : memref<1x16x256xbf16, #tpu.memory_space<vmem>>, vector<1x16x256xbf16>
    %59 = vector.shape_cast %58 : vector<1x16x256xbf16> to vector<16x256xbf16>
    %60 = vector.shape_cast %57 : vector<16x256xbf16> to vector<1x16x256xbf16>
    tpu.vector_store %arg6[%c0_36, %c0_37, %c0_38], %60 {strides = array<i32>} : memref<1x16x256xbf16, #tpu.memory_space<vmem>>, vector<1x16x256xbf16>,
    return
  }
  func.func @transform_0(%arg0: i32, %arg1: i32, %arg2: i32) -> (i32, i32, i32) {
    %c1_i32 = arith.constant 1 : i32
    %0 = arith.muli %arg0, %c1_i32 : i32
    %1 = arith.addi %0, %arg2 : i32
    %c0_i32 = arith.constant 0 : i32
    %c0_i32_0 = arith.constant 0 : i32
    return %arg1, %c0_i32, %1 : i32, i32, i32
  }
  func.func @transform_1(%arg0: i32, %arg1: i32, %arg2: i32) -> (i32, i32) {
    %c0_i32 = arith.constant 0 : i32
    %c0_i32_0 = arith.constant 0 : i32
    %c0_i32_1 = arith.constant 0 : i32
    return %c0_i32, %c0_i32_0 : i32, i32
  }
  func.func @transform_2(%arg0: i32, %arg1: i32, %arg2: i32) -> (i32, i32) {
    %c0_i32 = arith.constant 0 : i32
    %c0_i32_0 = arith.constant 0 : i32
    %c0_i32_1 = arith.constant 0 : i32
    return %c0_i32, %c0_i32_0 : i32, i32
  }
  func.func @transform_3(%arg0: i32, %arg1: i32, %arg2: i32) -> (i32, i32, i32) {
    %c1_i32 = arith.constant 1 : i32
    %0 = arith.muli %arg0, %c1_i32 : i32
    %1 = arith.addi %0, %arg2 : i32
    %c0_i32 = arith.constant 0 : i32
    %c0_i32_0 = arith.constant 0 : i32
    return %arg1, %c0_i32, %1 : i32, i32, i32
  }
  func.func @transform_4(%arg0: i32, %arg1: i32, %arg2: i32) -> (i32, i32, i32, i32) {
    %c0_i32 = arith.constant 0 : i32
    %c0_i32_0 = arith.constant 0 : i32
    %c0_i32_1 = arith.constant 0 : i32
    return %arg0, %arg1, %c0_i32, %c0_i32_0 : i32, i32, i32, i32
  }
  func.func @transform_5(%arg0: i32, %arg1: i32, %arg2: i32) -> (i32, i32, i32, i32) {
    %c0_i32 = arith.constant 0 : i32
    %c0_i32_0 = arith.constant 0 : i32
    %c0_i32_1 = arith.constant 0 : i32
    return %arg0, %arg1, %c0_i32, %c0_i32_0 : i32, i32, i32, i32
  }
  func.func @transform_6(%arg0: i32, %arg1: i32, %arg2: i32) -> (i32, i32, i32, i32) {
    %c0_i32 = arith.constant 0 : i32
    %c0_i32_0 = arith.constant 0 : i32
    %c0_i32_1 = arith.constant 0 : i32
    return %arg0, %arg1, %c0_i32, %c0_i32_0 : i32, i32, i32, i32
  }
}

</mosaic_0001>

<llo_original>
// kernel: tpu_custom_call.1
$region0: #{tpu_custom_call.1}
  #allocation0 [shape = 'u32[]', space=smem, size = 0x4, offset = 0x4, fixed_abs, tag = 'smem constant byte address 0x4 - core index']
  #allocation1 [shape = 'u32[144,128]{1,0:T(1,128)}', space=vmem, size = 0x12000, scoped, tag = 'internal scratch']
  %s0 = inlined_call_operand.vmem [shape: f32[2,4,256], index: 0, kind: input, shape index: {}]
  %s1 = inlined_call_operand.vmem [shape: bf16[48,4], index: 1, kind: input, shape index: {}]
  %s2 = inlined_call_operand.vmem [shape: f32[16,1], index: 2, kind: input, shape index: {}]
  %s3 = inlined_call_operand.hbm [shape: bf16[2,16,256], index: 3, kind: output, shape index: {0}]
  %s4 = inlined_call_operand.hbm [shape: f32[1,2,16,16], index: 4, kind: output, shape index: {1}]
  %s5 = inlined_call_operand.vmem [shape: f32[1,2,16,1], index: 5, kind: output, shape index: {2}]
  %s6 = inlined_call_operand.vmem [shape: f32[1,2,16,1], index: 6, kind: output, shape index: {3}]
  %7 = xla_tuple %s3, %s4, %s5, %s6
  %s8 = sld [smem:[#allocation0]]
  $region73: #{tpu_custom_call.1} parent=0
    _
  %s10 = ssub.s32 1, %s8
  %s11 = scalar_select 0, %s10, %s8
  $region1: #{tpu_custom_call.1} parent=0
    #allocation2 [shape = 'u8[16384]{0}', space=vmem, size = 0x4000, scoped, tag = 'output window, operand 0']
    #allocation3 [shape = 's32[2]{0}', space=sflag, size = 0x8, scoped, tag = 'scoped memory for tpu_custom_call.1']
    #allocation4 [shape = 'u8[16384]{0}', space=vmem, size = 0x4000, scoped, tag = 'output window, operand 1']
    #allocation5 [shape = 's32[2]{0}', space=sflag, size = 0x8, scoped, tag = 'scoped memory for tpu_custom_call.1']
    %12 = vsyncpa [#allocation3], 0
    %s13 = scalar_lea.sflag [#allocation3], 1
    %14 = vsyncpa %s13, 0
    %15 = vsyncpa [#allocation5], 0
    %s16 = scalar_lea.sflag [#allocation5], 1
    %17 = vsyncpa %s16, 0
    loop: start=0, step=1, limit=4
    $region2: #{tpu_custom_call.1} parent=1 // loop_pre_header
      _
    $region3: #{tpu_custom_call.1} parent=1 // loop_header
      %s19 = sphi 0, %s23
      %p20 = scmp.ge.s32.totalorder %s19, 4
      %s26 = sphi 0, %s45
      %s27 = sphi 0, %s41
      %s28 = sphi 0, %s37
      %s29 = sphi 0, %s26
      %s30 = sphi 0, %s27
      %s31 = sphi 0, %s28
      %s32 = sphi 0, %s29
      %s33 = sphi 0, %s30
      %s34 = sphi 0, %s31
      %s52 = sphi 0, %s54
      %s55 = sphi 0, %s52
      %s56 = sphi 0, %s55
      %s72 = sphi 0, %s56
      %s76 = sphi 0, %s76
      %s78 = sphi 0, %s76
      %s79 = sphi 0, %s78
      %s93 = sphi 0, %s79
      %s97 = sphi 0, %s97
      %s99 = sphi 0, %s97
      %s100 = sphi 0, %s99
      %s114 = sphi 0, %s100
      %s124 = sphi 0, %s126
      %s127 = sphi 0, %s124
      %s128 = sphi 0, %s127
      %s144 = sphi 0, %s128
      %s152 = sphi 0, %s154
      %s155 = sphi 0, %s152
      %s156 = sphi 0, %s155
      %s172 = sphi 0, %s156
      %s180 = sphi 0, %s182
      %s183 = sphi 0, %s180
      %s184 = sphi 0, %s183
      %s200 = sphi 0, %s184
      %s208 = sphi 0, %s210
      %s211 = sphi 0, %s208
      %s212 = sphi 0, %s211
      %s228 = sphi 0, %s212
    $region4: #{tpu_custom_call.1} parent=1 // loop_header_branch
      %22 = sbr.rel (%p20) target = $region8
    $region5: #{tpu_custom_call.1} parent=1 // loop_body
      %s24 = ssub.s32 %s19, 1
      %s25 = ssub.s32 %s19, 2
      %s35 = sadd.s32 1, %s28
      %p36 = scmp.ge.s32.totalorder %s35, 1
      %s37 = scalar_select %p36, 0, %s35
      %s38 = sadd.s32 1, %s27
      %s39 = scalar_select %p36, %s38, %s27
      %p40 = scmp.ge.s32.totalorder %s39, 2
      %s41 = scalar_select %p40, 0, %s39
      %s42 = sadd.s32 1, %s26
      %s43 = scalar_select %p40, %s42, %s26
      %p44 = scmp.ge.s32.totalorder %s43, 1
      %s45 = scalar_select %p44, 0, %s43
      %s46 = sadd.s32 %s26, %s28
      %s47 = sadd.s32 %s45, %s37
      %s48 = ssub.s32 %s27, %s41
      %s49 = ssub.s32 %s46, %s47
      %s50 = sor.u32 %s48, %s49
      %p51 = scmp.eq.s32.totalorder %s50, 0
      %s53 = sadd.s32 %s52, 1
      %s54 = scalar_select %p51, %s52, %s53
      %p57 = pneg %p51
      %p58 = scmp.eq.s32.totalorder %s19, 1
      %p59 = por %p57, %p58
      %p60 = scmp.ne.s32.totalorder %s52, %s55
      %p61 = scmp.eq.s32.totalorder %s19, 0
      %p62 = por %p60, %p61
      %p63 = scmp.ne.s32.totalorder %s52, %s55
      %p64 = scmp.eq.s32.totalorder %s24, 1
      %p65 = por %p63, %p64
      %p66 = scmp.ne.s32.totalorder %s55, %s56
      %p67 = scmp.eq.s32.totalorder %s24, 0
      %p68 = por %p66, %p67
      %p69 = scmp.ne.s32.totalorder %s55, %s56
      %p70 = scmp.eq.s32.totalorder %s25, 1
      %p71 = por %p69, %p70
      %p73 = scmp.ne.s32.totalorder %s56, %s72
      %p74 = scmp.eq.s32.totalorder %s25, 0
      %p75 = por %p73, %p74
      %s77 = sadd.s32 %s76, 1
      %p80 = scmp.eq.s32.totalorder %s19, 1
      %p81 = scmp.ne.s32.totalorder %s76, %s78
      %p82 = scmp.eq.s32.totalorder %s19, 0
      %p83 = por %p81, %p82
      %p84 = scmp.ne.s32.totalorder %s76, %s78
      %p85 = scmp.eq.s32.totalorder %s24, 1
      %p86 = por %p84, %p85
      %p87 = scmp.ne.s32.totalorder %s78, %s79
      %p88 = scmp.eq.s32.totalorder %s24, 0
      %p89 = por %p87, %p88
      %p90 = scmp.ne.s32.totalorder %s78, %s79
      %p91 = scmp.eq.s32.totalorder %s25, 1
      %p92 = por %p90, %p91
      %p94 = scmp.ne.s32.totalorder %s79, %s93
      %p95 = scmp.eq.s32.totalorder %s25, 0
      %p96 = por %p94, %p95
      %s98 = sadd.s32 %s97, 1
      %p101 = scmp.eq.s32.totalorder %s19, 1
      %p102 = scmp.ne.s32.totalorder %s97, %s99
      %p103 = scmp.eq.s32.totalorder %s19, 0
      %p104 = por %p102, %p103
      %p105 = scmp.ne.s32.totalorder %s97, %s99
      %p106 = scmp.eq.s32.totalorder %s24, 1
      %p107 = por %p105, %p106
      %p108 = scmp.ne.s32.totalorder %s99, %s100
      %p109 = scmp.eq.s32.totalorder %s24, 0
      %p110 = por %p108, %p109
      %p111 = scmp.ne.s32.totalorder %s99, %s100
      %p112 = scmp.eq.s32.totalorder %s25, 1
      %p113 = por %p111, %p112
      %p115 = scmp.ne.s32.totalorder %s100, %s114
      %p116 = scmp.eq.s32.totalorder %s25, 0
      %p117 = por %p115, %p116
      %s118 = sadd.s32 %s26, %s28
      %s119 = sadd.s32 %s45, %s37
      %s120 = ssub.s32 %s27, %s41
      %s121 = ssub.s32 %s118, %s119
      %s122 = sor.u32 %s120, %s121
      %p123 = scmp.eq.s32.totalorder %s122, 0
      %s125 = sadd.s32 %s124, 1
      %s126 = scalar_select %p123, %s124, %s125
      %p129 = pneg %p123
      %p130 = scmp.eq.s32.totalorder %s19, 1
      %p131 = por %p129, %p130
      %p132 = scmp.ne.s32.totalorder %s124, %s127
      %p133 = scmp.eq.s32.totalorder %s19, 0
      %p134 = por %p132, %p133
      %p135 = scmp.ne.s32.totalorder %s124, %s127
      %p136 = scmp.eq.s32.totalorder %s24, 1
      %p137 = por %p135, %p136
      %p138 = scmp.ne.s32.totalorder %s127, %s128
      %p139 = scmp.eq.s32.totalorder %s24, 0
      %p140 = por %p138, %p139
      %p141 = scmp.ne.s32.totalorder %s127, %s128
      %p142 = scmp.eq.s32.totalorder %s25, 1
      %p143 = por %p141, %p142
      %p145 = scmp.ne.s32.totalorder %s128, %s144
      %p146 = scmp.eq.s32.totalorder %s25, 0
      %p147 = por %p145, %p146
      %s148 = ssub.s32 %s26, %s45
      %s149 = ssub.s32 %s27, %s41
      %s150 = sor.u32 %s148, %s149
      %p151 = scmp.eq.s32.totalorder %s150, 0
      %s153 = sadd.s32 %s152, 1
      %s154 = scalar_select %p151, %s152, %s153
      %p157 = pneg %p151
      %p158 = scmp.eq.s32.totalorder %s19, 1
      %p159 = por %p157, %p158
      %p160 = scmp.ne.s32.totalorder %s152, %s155
      %p161 = scmp.eq.s32.totalorder %s19, 0
      %p162 = por %p160, %p161
      %p163 = scmp.ne.s32.totalorder %s152, %s155
      %p164 = scmp.eq.s32.totalorder %s24, 1
      %p165 = por %p163, %p164
      %p166 = scmp.ne.s32.totalorder %s155, %s156
      %p167 = scmp.eq.s32.totalorder %s24, 0
      %p168 = por %p166, %p167
      %p169 = scmp.ne.s32.totalorder %s155, %s156
      %p170 = scmp.eq.s32.totalorder %s25, 1
      %p171 = por %p169, %p170
      %p173 = scmp.ne.s32.totalorder %s156, %s172
      %p174 = scmp.eq.s32.totalorder %s25, 0
      %p175 = por %p173, %p174
      %s176 = ssub.s32 %s26, %s45
      %s177 = ssub.s32 %s27, %s41
      %s178 = sor.u32 %s176, %s177
      %p179 = scmp.eq.s32.totalorder %s178, 0
      %s181 = sadd.s32 %s180, 1
      %s182 = scalar_select %p179, %s180, %s181
      %p185 = pneg %p179
      %p186 = scmp.eq.s32.totalorder %s19, 1
      %p187 = por %p185, %p186
      %p188 = scmp.ne.s32.totalorder %s180, %s183
      %p189 = scmp.eq.s32.totalorder %s19, 0
      %p190 = por %p188, %p189
      %p191 = scmp.ne.s32.totalorder %s180, %s183
      %p192 = scmp.eq.s32.totalorder %s24, 1
      %p193 = por %p191, %p192
      %p194 = scmp.ne.s32.totalorder %s183, %s184
      %p195 = scmp.eq.s32.totalorder %s24, 0
      %p196 = por %p194, %p195
      %p197 = scmp.ne.s32.totalorder %s183, %s184
      %p198 = scmp.eq.s32.totalorder %s25, 1
      %p199 = por %p197, %p198
      %p201 = scmp.ne.s32.totalorder %s184, %s200
      %p202 = scmp.eq.s32.totalorder %s25, 0
      %p203 = por %p201, %p202
      %s204 = ssub.s32 %s26, %s45
      %s205 = ssub.s32 %s27, %s41
      %s206 = sor.u32 %s204, %s205
      %p207 = scmp.eq.s32.totalorder %s206, 0
      %s209 = sadd.s32 %s208, 1
      %s210 = scalar_select %p207, %s208, %s209
      %p213 = pneg %p207
      %p214 = scmp.eq.s32.totalorder %s19, 1
      %p215 = por %p213, %p214
      %p216 = scmp.ne.s32.totalorder %s208, %s211
      %p217 = scmp.eq.s32.totalorder %s19, 0
      %p218 = por %p216, %p217
      %p219 = scmp.ne.s32.totalorder %s208, %s211
      %p220 = scmp.eq.s32.totalorder %s24, 1
      %p221 = por %p219, %p220
      %p222 = scmp.ne.s32.totalorder %s211, %s212
      %p223 = scmp.eq.s32.totalorder %s24, 0
      %p224 = por %p222, %p223
      %p225 = scmp.ne.s32.totalorder %s211, %s212
      %p226 = scmp.eq.s32.totalorder %s25, 1
      %p227 = por %p225, %p226
      %p229 = scmp.ne.s32.totalorder %s212, %s228
      %p230 = scmp.eq.s32.totalorder %s25, 0
      %p231 = por %p229, %p230
      %p232 = scmp.le.s32.totalorder 1, %s19
      %p233 = scmp.lt.s32.totalorder %s19, 3
      %p234 = pnand %p232, %p233
      %p235 = pneg %p234
      // Predicated region
      $region9: #{tpu_custom_call.1} parent=5 // pred_check
        _
      $region10: #{tpu_custom_call.1} parent=5 // pred_check_branch
        %237 = sbr.rel (%p234) target = $region12
      $region11: #{tpu_custom_call.1} parent=5 // pred_region
        %s238 = ssub.s32 %s19, 1
        // Predicated region
        $region13: #{tpu_custom_call.1} parent=11 // pred_check
          %p239 = pneg %p89
        $region14: #{tpu_custom_call.1} parent=11 // pred_check_branch
          %241 = sbr.rel (%p239) target = $region16
        $region15: #{tpu_custom_call.1} parent=11 // pred_region
          _
        $region16: #{tpu_custom_call.1} parent=11 // pred_fallthru
          _
        // Predicated region
        $region17: #{tpu_custom_call.1} parent=11 // pred_check
          %p242 = pneg %p110
        $region18: #{tpu_custom_call.1} parent=11 // pred_check_branch
          %244 = sbr.rel (%p242) target = $region20
        $region19: #{tpu_custom_call.1} parent=11 // pred_region
          _
        $region20: #{tpu_custom_call.1} parent=11 // pred_fallthru
          _
      $region12: #{tpu_custom_call.1} parent=5 // pred_fallthru
        _
      %p245 = scmp.lt.s32.totalorder %s19, 2
      // Predicated region
      $region21: #{tpu_custom_call.1} parent=5 // pred_check
        %p246 = pneg %p245
      $region22: #{tpu_custom_call.1} parent=5 // pred_check_branch
        %248 = sbr.rel (%p246) target = $region24
      $region23: #{tpu_custom_call.1} parent=5 // pred_region
        // Predicated region
        $region25: #{tpu_custom_call.1} parent=23 // pred_check
          %p249 = pneg %p62
        $region26: #{tpu_custom_call.1} parent=23 // pred_check_branch
          %251 = sbr.rel (%p249) target = $region28
        $region27: #{tpu_custom_call.1} parent=23 // pred_region
          %s252 = sadd.s32 %s26, %s28
          %s253 = smul.u32 2, %s252
          %p254 = scmp.lt.s32.totalorder %s27, 1
          %s255 = scalar_select %p254, %s27, 1
          %p256 = scmp.lt.s32.totalorder %s253, 1
          %s257 = scalar_select %p256, %s253, 1
          %s258 = smul.addr %s255, 2
          %s259 = sadd.s32 %s257, %s258
          %s260 = smul.addr %s259, 4
          %s261 = scalar_lea.vmem %s0, %s260
          %s262 = sadd.s32 %s26, %s28
          %s263 = smul.u32 2, %s262
        $region28: #{tpu_custom_call.1} parent=23 // pred_fallthru
          _
      $region24: #{tpu_custom_call.1} parent=5 // pred_fallthru
        _
      %p264 = scmp.le.s32.totalorder 1, %s19
      %p265 = scmp.lt.s32.totalorder %s19, 3
      %p266 = pnand %p264, %p265
      %p267 = pneg %p266
      // Predicated region
      $region29: #{tpu_custom_call.1} parent=5 // pred_check
        _
      $region30: #{tpu_custom_call.1} parent=5 // pred_check_branch
        %269 = sbr.rel (%p266) target = $region32
      $region31: #{tpu_custom_call.1} parent=5 // pred_region
        %s270 = ssub.s32 %s19, 1
        %s271 = sadd.s32 %s29, %s31
        %s272 = smul.u32 2, %s271
        %p273 = scmp.lt.s32.totalorder %s30, 1
        %s274 = scalar_select %p273, %s30, 1
        %p275 = scmp.lt.s32.totalorder %s272, 1
        %s276 = scalar_select %p275, %s272, 1
        %s277 = smul.addr %s274, 2
        %s278 = sadd.s32 %s276, %s277
        %s279 = smul.addr %s278, 4
        %s280 = scalar_lea.vmem %s0, %s279
        %p281 = pneg %p68
        %p282 = pneg %p65
        %p283 = pneg %p89
        %p284 = pneg %p86
        %p285 = pneg %p110
        %p286 = pneg %p107
        %p287 = pneg %p140
        %p288 = pneg %p137
        %s289 = sand.u32 %s127, 1
        %s290 = scalar_lea.sflag [#allocation3], %s289
        %s291 = sand.u32 %s127, 1
        %s292 = smul.addr %s291, 16
        %s293 = scalar_lea.vmem [#allocation2], %s292
        %p294 = pneg %p168
        %p295 = pneg %p165
        %s296 = sand.u32 %s155, 1
        %s297 = scalar_lea.sflag [#allocation5], %s296
        %s298 = sand.u32 %s155, 1
        %s299 = smul.addr %s298, 16
        %s300 = scalar_lea.vmem [#allocation4], %s299
        %p301 = pneg %p196
        %p302 = pneg %p193
        %p303 = scmp.lt.s32.totalorder %s29, 0
        %s304 = scalar_select %p303, %s29, 0
        %p305 = scmp.lt.s32.totalorder %s30, 1
        %s306 = scalar_select %p305, %s30, 1
        %s307 = smul.addr %s306, 2
        %s308 = smul.addr %s304, 4
        %s309 = sadd.s32 %s307, %s308
        %s310 = smul.addr %s309, 8
        %s311 = scalar_lea.vmem %s5, %s310
        %p312 = pneg %p224
        %p313 = pneg %p221
        %p314 = scmp.lt.s32.totalorder %s29, 0
        %s315 = scalar_select %p314, %s29, 0
        %p316 = scmp.lt.s32.totalorder %s30, 1
        %s317 = scalar_select %p316, %s30, 1
        %s318 = smul.addr %s317, 2
        %s319 = smul.addr %s315, 4
        %s320 = sadd.s32 %s318, %s319
        %s321 = smul.addr %s320, 8
        %s322 = scalar_lea.vmem %s6, %s321
        %s323 = sadd.s32 %s29, %s31
        %s324 = smul.u32 2, %s323
        %p325 = scmp.lt.s32.totalorder %s30, 1
        %s326 = scalar_select %p325, %s30, 1
        %p327 = scmp.lt.s32.totalorder %s324, 1
        %s328 = scalar_select %p327, %s324, 1
        %s329 = smul.addr %s326, 2
        %s330 = sadd.s32 %s328, %s329
        %s331 = smul.addr %s330, 4
        %s332 = scalar_lea.vmem %s0, %s331
        %s333 = sadd.s32 %s29, %s31
        %s334 = smul.u32 2, %s333
        %s335 = sadd.s32 %s29, %s31
        %s336 = smul.u32 2, %s335
        %p337 = scmp.lt.s32.totalorder %s29, 0
        %s338 = scalar_select %p337, %s29, 0
        %p339 = scmp.lt.s32.totalorder %s30, 1
        %s340 = scalar_select %p339, %s30, 1
        %s341 = smul.addr %s340, 2
        %s342 = smul.addr %s338, 4
        %s343 = sadd.s32 %s341, %s342
        %s344 = smul.addr %s343, 8
        %s345 = scalar_lea.vmem %s5, %s344
        %p346 = scmp.lt.s32.totalorder %s29, 0
        %s347 = scalar_select %p346, %s29, 0
        %p348 = scmp.lt.s32.totalorder %s30, 1
        %s349 = scalar_select %p348, %s30, 1
        %s350 = smul.addr %s349, 2
        %s351 = smul.addr %s347, 4
        %s352 = sadd.s32 %s350, %s351
        %s353 = smul.addr %s352, 8
        %s354 = scalar_lea.vmem %s6, %s353
        %p356 = scmp.eq.s32.totalorder %s31, 0
        // Predicated region
        $region33: #{tpu_custom_call.1} parent=31 // pred_check
          %p357 = pneg %p356
        $region34: #{tpu_custom_call.1} parent=31 // pred_check_branch
          %359 = sbr.rel (%p357) target = $region36
        $region35: #{tpu_custom_call.1} parent=31 // pred_region
          %vm360 = vcmask 130048
          %361 = vst.msk [vmem:[%s300] sm:$0xff] %vm360, 0.0
          %362 = vst.msk [vmem:[%s300 + $0x8] sm:$0xff] %vm360, 0.0
          %vm363 = vcmask 7168
          %364 = vst.msk [vmem:[%s345] sm:$0xff] %vm363, -1e+30
          %365 = vst.msk [vmem:[%s345 + $0x8] sm:$0xff] %vm363, -1e+30
          %366 = vst.msk [vmem:[%s354] sm:$0xff] %vm363, 0.0
          %367 = vst.msk [vmem:[%s354 + $0x8] sm:$0xff] %vm363, 0.0
        $region36: #{tpu_custom_call.1} parent=31 // pred_fallthru
          _
        %v368 = vld [vmem:[%s332] sm:$0xff]
        %v370 = vcombine.high %v368, %v368
        %v372 = vpack.c.bf16 %v368, %v368
        %v373 = vpack.c.bf16 %v370, %v370
        %v374 = vld [vmem:[%s1] sm:$0xf]
        %v375 = vld [vmem:[%s1 + $0x4] sm:$0xf]
        %v376 = vld [vmem:[%s1 + $0x8] sm:$0xf]
        %v377 = vld [vmem:[%s1 + $0xc] sm:$0xf]
        %v378 = vld [vmem:[%s1 + $0x10] sm:$0xf]
        %v379 = vld [vmem:[%s1 + $0x14] sm:$0xf]
        %v386 = vunpack.c.l.b16 %v374
        %v387 = vunpack.c.l.b16 %v375
        %v388 = vunpack.c.l.b16 %v376
        %v389 = vunpack.c.l.b16 %v377
        %v390 = vunpack.c.l.b16 %v378
        %v391 = vunpack.c.l.b16 %v379
        %v392 = vpack.c.b16 %v387, %v386
        %v393 = vpack.c.b16 %v389, %v388
        %v394 = vpack.c.b16 %v391, %v390
        %vm395 = vcmask 31744
        %v397 = vsel %vm395, %v392, 0
        %v400 = vsel %vm395, %v393, 0
        %v403 = vsel %vm395, %v394, 0
        %vm405 = vcmask 1041408
        %v407 = vsel %vm405, %v372, 0
        %v410 = vsel %vm405, %v373, 0
        %412 = vmatprep.subr.bf16.mxu0 0
        %413 = vmatpush1.bf16.msra.mxu0 0
        %414 = vmatprep.subr.bf16.mxu0 0
        %415 = vmatpush1.bf16.msra.mxu0 0
        %416 = vmatprep.subr.bf16.mxu0 0
        %417 = vmatpush1.bf16.msra.mxu0 0
        %418 = vmatprep.subr.bf16.mxu0 0
        %419 = vmatpush1.bf16.msra.mxu0 0
        %420 = vmatprep.subr.bf16.mxu0 0
        %421 = vmatpush1.bf16.msra.mxu0 0
        %422 = vmatprep.subr.bf16.mxu0 0
        %423 = vmatpush1.bf16.msra.mxu0 0
        %424 = vmatprep.subr.bf16.mxu0 0
        %425 = vmatpush1.bf16.msra.mxu0 0
        %426 = vmatprep.subr.bf16.mxu0 %v410
        %427 = vmatpush1.bf16.msra.mxu0 %v407
        %428 = vmatprep.subr.bf16.mxu0 0
        %429 = vmatpush2.bf16.msra.mxu0 0
        %430 = vmatprep.subr.bf16.mxu0 0
        %431 = vmatpush2.bf16.msra.mxu0 0
        %432 = vmatprep.subr.bf16.mxu0 0
        %433 = vmatpush2.bf16.msra.mxu0 0
        %434 = vmatprep.subr.bf16.mxu0 0
        %435 = vmatpush2.bf16.msra.mxu0 0
        %436 = vmatprep.subr.bf16.mxu0 0
        %437 = vmatpush2.bf16.msra.mxu0 0
        %438 = vmatprep.subr.bf16.mxu0 0
        %439 = vmatpush2.bf16.msra.mxu0 0
        %440 = vmatprep.subr.bf16.mxu0 0
        %441 = vmatpush2.bf16.msra.mxu0 0
        %442 = vmatprep.subr.bf16.mxu0 0
        %443 = vmatpush2.bf16.msra.mxu0 0
        %444 = vmatprep.mubr.bf16.mxu0 0
        %445 = vmatmul.mubr.bf16.gmra.mxu0 %v397
        %v446 = vpop.f32.mrf.mxu0
        %v447 = vadd.f32 0.0, %v446
        %v448 = vpop.f32.mrf.mxu0
        %v449 = vadd.f32 0.0, %v448
        %v450 = vpop.f32.mrf.mxu0
        %v451 = vadd.f32 0.0, %v450
        %v452 = vpop.f32.mrf.mxu0
        %v453 = vadd.f32 0.0, %v452
        %454 = vmatprep.mubr.bf16.mxu0 0
        %455 = vmatmul.mubr.bf16.gmra.mxu0 %v400
        %v456 = vpop.f32.mrf.mxu0
        %v457 = vadd.f32 0.0, %v456
        %v458 = vpop.f32.mrf.mxu0
        %v459 = vadd.f32 0.0, %v458
        %v460 = vpop.f32.mrf.mxu0
        %v461 = vadd.f32 0.0, %v460
        %v462 = vpop.f32.mrf.mxu0
        %v463 = vadd.f32 0.0, %v462
        %464 = vmatprep.mubr.bf16.mxu0 0
        %465 = vmatmul.mubr.bf16.gmra.mxu0 %v403
        %v466 = vpop.f32.mrf.mxu0
        %v467 = vadd.f32 0.0, %v466
        %v468 = vpop.f32.mrf.mxu0
        %v469 = vadd.f32 0.0, %v468
        %v470 = vpop.f32.mrf.mxu0
        %v471 = vadd.f32 0.0, %v470
        %v472 = vpop.f32.mrf.mxu0
        %v473 = vadd.f32 0.0, %v472
        %474 = vdwg.mxu0
        %v475 = vld [vmem:[%s2] sm:$0xff]
        %v476 = vld [vmem:[%s2 + $0x8] sm:$0xff]
        %478 = vset.pattern.permute.xlu0 0
        %479 = vperm.xlu0 %478, %v475
        %v480 = vpop.permute.xlu0 %479
        %483 = vset.pattern.permute.xlu0 0
        %484 = vperm.xlu0 %483, %v476
        %v485 = vpop.permute.xlu0 %484
        %v487 = vadd.f32 %v467, %v480
        %v488 = vadd.f32 %v469, %v480
        %v489 = vadd.f32 %v471, %v485
        %v490 = vadd.f32 %v473, %v485
        %v491 = vld [vmem:[%s345] sm:$0xff]
        %v492 = vld [vmem:[%s345 + $0x8] sm:$0xff]
        %v493 = vmax.f32 %v457, %v459
        %494 = vmax.xlane.f32.xlu0 %v493
        %v495 = vpop.xlane.xlu0 %494
        %v496 = vmax.f32 %v461, %v463
        %497 = vmax.xlane.f32.xlu0 %v496
        %v498 = vpop.xlane.xlu0 %497
        %v499 = vmax.f32 %v491, %v495
        %v500 = vmax.f32 %v492, %v498
        %v501 = vsub.f32 %v491, %v499
        %v502 = vsub.f32 %v492, %v500
        %v503 = vmul.f32 %v501, 1.442695
        %v504 = vpow.pop %v503
        %v505 = vmul.f32 %v502, 1.442695
        %v506 = vpow.pop %v505
        %508 = vset.pattern.permute.xlu0 0
        %509 = vperm.xlu0 %508, %v499
        %v510 = vpop.permute.xlu0 %509
        %513 = vset.pattern.permute.xlu0 0
        %514 = vperm.xlu0 %513, %v500
        %v515 = vpop.permute.xlu0 %514
        %v517 = vsub.f32 %v457, %v510
        %v518 = vsub.f32 %v459, %v510
        %v519 = vsub.f32 %v461, %v515
        %v520 = vsub.f32 %v463, %v515
        %v521 = vmul.f32 %v517, 1.442695
        %v522 = vpow.pop %v521
        %v523 = vmul.f32 %v518, 1.442695
        %v524 = vpow.pop %v523
        %v525 = vmul.f32 %v519, 1.442695
        %v526 = vpow.pop %v525
        %v527 = vmul.f32 %v520, 1.442695
        %v528 = vpow.pop %v527
        %v529 = vld [vmem:[%s354] sm:$0xff]
        %v530 = vld [vmem:[%s354 + $0x8] sm:$0xff]
        %v531 = vmul.f32 %v504, %v529
        %v532 = vmul.f32 %v506, %v530
        %v533 = vadd.f32 %v522, %v524
        %534 = vadd.xlane.f32.xlu0 %v533
        %v535 = vpop.xlane.xlu0 %534
        %v536 = vadd.f32 %v526, %v528
        %537 = vadd.xlane.f32.xlu0 %v536
        %v538 = vpop.xlane.xlu0 %537
        %v539 = vadd.f32 %v531, %v535
        %v540 = vadd.f32 %v532, %v538
        %vm541 = vcmask 7168
        %542 = vst.msk [vmem:[%s354] sm:$0xff] %vm541, %v539
        %543 = vst.msk [vmem:[%s354 + $0x8] sm:$0xff] %vm541, %v540
        %v544 = vld [vmem:[%s300] sm:$0xff]
        %v545 = vld [vmem:[%s300 + $0x8] sm:$0xff]
        %547 = vset.pattern.permute.xlu0 0
        %548 = vperm.xlu0 %547, %v504
        %v549 = vpop.permute.xlu0 %548
        %552 = vset.pattern.permute.xlu0 0
        %553 = vperm.xlu0 %552, %v506
        %v554 = vpop.permute.xlu0 %553
        %v556 = vmul.f32 %v549, %v544
        %v557 = vmul.f32 %v554, %v545
        %v558 = vpack.c.bf16 %v526, %v522
        %v559 = vpack.c.bf16 %v528, %v524
        %v560 = vpack.c.bf16 %v451, %v447
        %v561 = vpack.c.bf16 %v453, %v449
        %562 = vmatprep.subr.bf16.mxu0 0
        %563 = vmatpush1.bf16.xpose.msra.mxu0 0
        %564 = vmatprep.subr.bf16.mxu0 0
        %565 = vmatpush1.bf16.xpose.msra.mxu0 0
        %566 = vmatprep.subr.bf16.mxu0 0
        %567 = vmatpush1.bf16.xpose.msra.mxu0 0
        %568 = vmatprep.subr.bf16.mxu0 0
        %569 = vmatpush1.bf16.xpose.msra.mxu0 0
        %570 = vmatprep.subr.bf16.mxu0 0
        %571 = vmatpush1.bf16.xpose.msra.mxu0 0
        %572 = vmatprep.subr.bf16.mxu0 0
        %573 = vmatpush1.bf16.xpose.msra.mxu0 0
        %574 = vmatprep.subr.bf16.mxu0 0
        %575 = vmatpush1.bf16.xpose.msra.mxu0 0
        %576 = vmatprep.subr.bf16.mxu0 %v561
        %577 = vmatpush1.bf16.xpose.msra.mxu0 %v560
        %578 = vmatprep.subr.bf16.mxu0 0
        %579 = vmatpush2.bf16.xpose.msra.mxu0 0
        %580 = vmatprep.subr.bf16.mxu0 0
        %581 = vmatpush2.bf16.xpose.msra.mxu0 0
        %582 = vmatprep.subr.bf16.mxu0 0
        %583 = vmatpush2.bf16.xpose.msra.mxu0 0
        %584 = vmatprep.subr.bf16.mxu0 0
        %585 = vmatpush2.bf16.xpose.msra.mxu0 0
        %586 = vmatprep.subr.bf16.mxu0 0
        %587 = vmatpush2.bf16.xpose.msra.mxu0 0
        %588 = vmatprep.subr.bf16.mxu0 0
        %589 = vmatpush2.bf16.xpose.msra.mxu0 0
        %590 = vmatprep.subr.bf16.mxu0 0
        %591 = vmatpush2.bf16.xpose.msra.mxu0 0
        %592 = vmatprep.subr.bf16.mxu0 0
        %593 = vmatpush2.bf16.xpose.msra.mxu0 0
        %594 = vmatprep.mubr.bf16.mxu0 %v559
        %595 = vmatmul.mubr.bf16.gmra.mxu0 %v558
        %v596 = vpop.f32.mrf.mxu0
        %v597 = vadd.f32 0.0, %v596
        %v598 = vpop.f32.mrf.mxu0
        %v599 = vpop.f32.mrf.mxu0
        %v600 = vadd.f32 0.0, %v599
        %v601 = vpop.f32.mrf.mxu0
        %602 = vdwg.mxu0
        %v603 = vadd.f32 %v556, %v597
        %v604 = vadd.f32 %v557, %v600
        %vm605 = vcmask 130048
        %606 = vst.msk [vmem:[%s300] sm:$0xff] %vm605, %v603
        %607 = vst.msk [vmem:[%s300 + $0x8] sm:$0xff] %vm605, %v604
        %608 = vst.msk [vmem:[%s345] sm:$0xff] %vm541, %v499
        %609 = vst.msk [vmem:[%s345 + $0x8] sm:$0xff] %vm541, %v500
        %v610 = vmax.f32 %v487, %v489
        %v611 = vrot.slane %v610, 4
        %v612 = vmax.f32 %v610, %v611
        %v613 = vrot.slane %v612, 2
        %v614 = vmax.f32 %v612, %v613
        %v615 = vrot.slane %v614, 1
        %v616 = vmax.f32 %v614, %v615
        %v617 = vmax.f32 %v488, %v490
        %v618 = vrot.slane %v617, 4
        %v619 = vmax.f32 %v617, %v618
        %v620 = vrot.slane %v619, 2
        %v621 = vmax.f32 %v619, %v620
        %v622 = vrot.slane %v621, 1
        %v623 = vmax.f32 %v621, %v622
        %v624 = vsub.f32 %v487, %v616
        %v625 = vsub.f32 %v488, %v623
        %v626 = vsub.f32 %v489, %v616
        %v627 = vsub.f32 %v490, %v623
        %v628 = vmul.f32 %v624, 1.442695
        %v629 = vpow.pop %v628
        %v630 = vmul.f32 %v625, 1.442695
        %v631 = vpow.pop %v630
        %v632 = vmul.f32 %v626, 1.442695
        %v633 = vpow.pop %v632
        %v634 = vmul.f32 %v627, 1.442695
        %v635 = vpow.pop %v634
        %v636 = vadd.f32 %v629, %v633
        %v637 = vrot.slane %v636, 4
        %v638 = vadd.f32 %v636, %v637
        %v639 = vrot.slane %v638, 2
        %v640 = vadd.f32 %v638, %v639
        %v641 = vrot.slane %v640, 1
        %v642 = vadd.f32 %v640, %v641
        %v643 = vadd.f32 %v631, %v635
        %v644 = vrot.slane %v643, 4
        %v645 = vadd.f32 %v643, %v644
        %v646 = vrot.slane %v645, 2
        %v647 = vadd.f32 %v645, %v646
        %v648 = vrot.slane %v647, 1
        %v649 = vadd.f32 %v647, %v648
        %v650 = vrcp.pop %v642
        %v651 = vrcp.pop %v649
        %v652 = vmul.f32 %v629, %v650
        %v653 = vmul.f32 %v631, %v651
        %v654 = vmul.f32 %v633, %v650
        %v655 = vmul.f32 %v635, %v651
        %v656 = vpack.c.bf16 %v654, %v652
        %v657 = vpack.c.bf16 %v655, %v653
        %v660 = vunpack.c.l.b16 %v656
        %v661 = vunpack.c.l.b16 %v657
        %v662 = vunpack.c.h.b16 %v656
        %v663 = vunpack.c.h.b16 %v657
        %v664 = vpack.c.b16 %v661, %v660
        %v665 = vpack.c.b16 %v663, %v662
        %668 = vst [vmem:[%s293] sm:$0xff] %v664
        %669 = vst [vmem:[%s293 + $0x8] sm:$0xff] %v665
        %s670 = sand.u32 %s127, 1
        %s671 = scalar_lea.sflag [#allocation3], %s670
        %s672 = sand.u32 %s127, 1
        %s673 = smul.addr %s672, 16
        %s674 = scalar_lea.vmem [#allocation2], %s673
        %s675 = sand.u32 %s155, 1
        %s676 = scalar_lea.sflag [#allocation5], %s675
        %s677 = sand.u32 %s155, 1
        %s678 = smul.addr %s677, 16
        %s679 = scalar_lea.vmem [#allocation4], %s678
        %p680 = scmp.lt.s32.totalorder %s29, 0
        %s681 = scalar_select %p680, %s29, 0
        %p682 = scmp.lt.s32.totalorder %s30, 1
        %s683 = scalar_select %p682, %s30, 1
        %s684 = smul.addr %s683, 2
        %s685 = smul.addr %s681, 4
        %s686 = sadd.s32 %s684, %s685
        %s687 = smul.addr %s686, 8
        %s688 = scalar_lea.vmem %s5, %s687
        %p689 = scmp.lt.s32.totalorder %s29, 0
        %s690 = scalar_select %p689, %s29, 0
        %p691 = scmp.lt.s32.totalorder %s30, 1
        %s692 = scalar_select %p691, %s30, 1
        %s693 = smul.addr %s692, 2
        %s694 = smul.addr %s690, 4
        %s695 = sadd.s32 %s693, %s694
        %s696 = smul.addr %s695, 8
        %s697 = scalar_lea.vmem %s6, %s696
        // Predicated region
        $region37: #{tpu_custom_call.1} parent=31 // pred_check
          %p698 = pneg %p137
        $region38: #{tpu_custom_call.1} parent=31 // pred_check_branch
          %700 = sbr.rel (%p698) target = $region40
        $region39: #{tpu_custom_call.1} parent=31 // pred_region
          %s701 = sadd.s32 %s29, %s31
          %s702 = smul.u32 2, %s701
          %s704 = ssub.s32 256, 256
          %705 = vsyncadd %s671, %s704
          %s706 = smul.addr %s30, 4
          %s707 = sadd.s32 %s702, %s706
          %s708 = smul.addr %s707, 64
          %s709 = scalar_lea.hbm %s3, %s708
          %s710 = sshll.u32 %s674, 4
          %s711 = int_to_ptr.vmem [resolvable:$true] %s710
          %716 = dma.vmem_to_hbm [thread:$0]  %s711, 256, %s709, %s671, 128, 128, 8
        $region40: #{tpu_custom_call.1} parent=31 // pred_fallthru
          _
        // Predicated region
        $region41: #{tpu_custom_call.1} parent=31 // pred_check
          %p717 = pneg %p165
        $region42: #{tpu_custom_call.1} parent=31 // pred_check_branch
          %719 = sbr.rel (%p717) target = $region44
        $region43: #{tpu_custom_call.1} parent=31 // pred_region
          %s721 = ssub.s32 256, 256
          %722 = vsyncadd %s676, %s721
          %s723 = smul.addr %s30, 2
          %s724 = smul.addr %s29, 4
          %s725 = sadd.s32 %s723, %s724
          %s726 = smul.addr %s725, 128
          %s727 = scalar_lea.hbm %s4, %s726
          %s728 = sshll.u32 %s679, 4
          %s729 = int_to_ptr.vmem [resolvable:$true] %s728
          %734 = dma.vmem_to_hbm [thread:$0]  %s729, 256, %s727, %s676, 128, 128, 8
        $region44: #{tpu_custom_call.1} parent=31 // pred_fallthru
          _
        // Predicated region
        $region45: #{tpu_custom_call.1} parent=31 // pred_check
          %p735 = pneg %p193
        $region46: #{tpu_custom_call.1} parent=31 // pred_check_branch
          %737 = sbr.rel (%p735) target = $region48
        $region47: #{tpu_custom_call.1} parent=31 // pred_region
          _
        $region48: #{tpu_custom_call.1} parent=31 // pred_fallthru
          _
        // Predicated region
        $region49: #{tpu_custom_call.1} parent=31 // pred_check
          %p738 = pneg %p221
        $region50: #{tpu_custom_call.1} parent=31 // pred_check_branch
          %740 = sbr.rel (%p738) target = $region52
        $region51: #{tpu_custom_call.1} parent=31 // pred_region
          _
        $region52: #{tpu_custom_call.1} parent=31 // pred_fallthru
          _
      $region32: #{tpu_custom_call.1} parent=5 // pred_fallthru
        _
      %p741 = scmp.le.s32.totalorder 2, %s19
      // Predicated region
      $region53: #{tpu_custom_call.1} parent=5 // pred_check
        %p742 = pneg %p741
      $region54: #{tpu_custom_call.1} parent=5 // pred_check_branch
        %744 = sbr.rel (%p742) target = $region56
      $region55: #{tpu_custom_call.1} parent=5 // pred_region
        %s745 = ssub.s32 %s19, 2
        // Predicated region
        $region57: #{tpu_custom_call.1} parent=55 // pred_check
          %p746 = pneg %p143
        $region58: #{tpu_custom_call.1} parent=55 // pred_check_branch
          %748 = sbr.rel (%p746) target = $region60
        $region59: #{tpu_custom_call.1} parent=55 // pred_region
          %s749 = sand.u32 %s128, 1
          %s750 = scalar_lea.sflag [#allocation3], %s749
          %s751 = sand.u32 %s128, 1
          %s752 = smul.addr %s751, 16
          %s753 = scalar_lea.vmem [#allocation2], %s752
          %754 = dma.done %s750, 256
        $region60: #{tpu_custom_call.1} parent=55 // pred_fallthru
          _
        // Predicated region
        $region61: #{tpu_custom_call.1} parent=55 // pred_check
          %p755 = pneg %p171
        $region62: #{tpu_custom_call.1} parent=55 // pred_check_branch
          %757 = sbr.rel (%p755) target = $region64
        $region63: #{tpu_custom_call.1} parent=55 // pred_region
          %s758 = sand.u32 %s156, 1
          %s759 = scalar_lea.sflag [#allocation5], %s758
          %s760 = sand.u32 %s156, 1
          %s761 = smul.addr %s760, 16
          %s762 = scalar_lea.vmem [#allocation4], %s761
          %763 = dma.done %s759, 256
        $region64: #{tpu_custom_call.1} parent=55 // pred_fallthru
          _
        // Predicated region
        $region65: #{tpu_custom_call.1} parent=55 // pred_check
          %p764 = pneg %p199
        $region66: #{tpu_custom_call.1} parent=55 // pred_check_branch
          %766 = sbr.rel (%p764) target = $region68
        $region67: #{tpu_custom_call.1} parent=55 // pred_region
          %p767 = scmp.lt.s32.totalorder %s32, 0
          %s768 = scalar_select %p767, %s32, 0
          %p769 = scmp.lt.s32.totalorder %s33, 1
          %s770 = scalar_select %p769, %s33, 1
          %s771 = smul.addr %s770, 2
          %s772 = smul.addr %s768, 4
          %s773 = sadd.s32 %s771, %s772
          %s774 = smul.addr %s773, 8
          %s775 = scalar_lea.vmem %s5, %s774
        $region68: #{tpu_custom_call.1} parent=55 // pred_fallthru
          _
        // Predicated region
        $region69: #{tpu_custom_call.1} parent=55 // pred_check
          %p776 = pneg %p227
        $region70: #{tpu_custom_call.1} parent=55 // pred_check_branch
          %778 = sbr.rel (%p776) target = $region72
        $region71: #{tpu_custom_call.1} parent=55 // pred_region
          %p779 = scmp.lt.s32.totalorder %s32, 0
          %s780 = scalar_select %p779, %s32, 0
          %p781 = scmp.lt.s32.totalorder %s33, 1
          %s782 = scalar_select %p781, %s33, 1
          %s783 = smul.addr %s782, 2
          %s784 = smul.addr %s780, 4
          %s785 = sadd.s32 %s783, %s784
          %s786 = smul.addr %s785, 8
          %s787 = scalar_lea.vmem %s6, %s786
        $region72: #{tpu_custom_call.1} parent=55 // pred_fallthru
          _
      $region56: #{tpu_custom_call.1} parent=5 // pred_fallthru
        _
    $region6: #{tpu_custom_call.1} parent=1 // loop_footer
      %s23 = sadd.s32 1, %s19
    $region7: #{tpu_custom_call.1} parent=1 // loop_footer_branch
      %18 = sbr.rel target = $region3
    $region8: #{tpu_custom_call.1} parent=1 // loop_exit
      _
    %788 = vsyncpa [#allocation3], 1
    %s789 = scalar_lea.sflag [#allocation3], 1
    %790 = vsyncpa %s789, 1
    %791 = vsyncpa [#allocation5], 1
    %s792 = scalar_lea.sflag [#allocation5], 1
    %793 = vsyncpa %s792, 1

</llo_original>
